<compile_context>
chip_gen: v7x
topology: tpu7x:2x2x1
jax: 0.10.0
libtpu: 0.0.40
codegen_flags: <defaults>
</compile_context>

<pallas_src>
import functools

import jax
import jax.numpy as jnp
from jax.experimental import pallas as pl
from jax.experimental.pallas import tpu as pltpu


_PAD_BIAS = -1e30  # bias for padded logit columns -> exp() underflows to 0.


def _round_up(v, m):
    return (v + m - 1) // m * m


def decoder_event_kernel(x_ref, attn_ref, wh_ref, bh_ref, wo_ref, bo_ref, o_ref):
    """One batch tile of the DecoderEvent forward pass.

    x_ref    : (TB, C, H)   input samples (f32 or bf16)
    attn_ref : (TB, C)      attention weights
    wh_ref   : (H,  Hp)     hidden weight, (in, out), out padded to 128
    bh_ref   : (1,  Hp)     hidden bias (f32), pad = 0
    wo_ref   : (Hp, Op)     out weight, (in, out), both padded to 128
    bo_ref   : (1,  Op)     out bias (f32), pad = -1e30
    o_ref    : (TB, Op)     log-softmax output (f32)
    """
    # --- attention application: VPU broadcast-multiply + reduce over C -----
    # (keeps the MXU free; avoids B degenerate (1,C)x(C,H) matmuls)
    x = x_ref[...].astype(jnp.float32)                    # (TB, C, H)
    attn = attn_ref[...].astype(jnp.float32)              # (TB, C)
    attn_applied = jnp.sum(attn[:, :, None] * x, axis=1)  # (TB, H) f32

    # --- hidden Linear + relu (MXU, f32 accumulation) -----------------------
    h = jnp.dot(
        attn_applied.astype(wh_ref.dtype), wh_ref[...],
        preferred_element_type=jnp.float32,
    )
    h = jnp.maximum(h + bh_ref[...], 0.0)                 # (TB, Hp) f32

    # --- out Linear ----------------------------------------------------------
    logits = jnp.dot(
        h.astype(wo_ref.dtype), wo_ref[...],
        preferred_element_type=jnp.float32,
    )
    logits = logits + bo_ref[...]                         # pad cols ~ -1e30

    # --- numerically stable log_softmax over the lane (feature) dim ---------
    m = jnp.max(logits, axis=1, keepdims=True)
    shifted = logits - m
    lse = jnp.log(jnp.sum(jnp.exp(shifted), axis=1, keepdims=True))
    o_ref[...] = (shifted - lse).astype(o_ref.dtype)


def prepare_decoder_event_params(w_hidden, b_hidden, w_out, b_out,
                                 *, param_dtype=jnp.float32):
    """One-time parameter prep (do this at load time, NOT per forward call).

    Transposes PyTorch (out_features, in_features) weights to (in, out) and
    pads feature dims to multiples of 128 so the kernel is lane-dense.
    Padded hidden cols get zero weight/bias (=> relu(0)=0, exact); padded
    logit cols get a -1e30 bias so they vanish from the softmax denominator.
    """
    H = w_hidden.shape[0]
    O = w_out.shape[0]
    Hp = _round_up(H, 128)
    Op = _round_up(O, 128)

    wh_t = jnp.zeros((H, Hp), param_dtype).at[:, :H].set(
        jnp.transpose(w_hidden).astype(param_dtype))
    bh = jnp.zeros((1, Hp), jnp.float32).at[0, :H].set(
        b_hidden.astype(jnp.float32))
    wo_t = jnp.zeros((Hp, Op), param_dtype).at[:H, :O].set(
        jnp.transpose(w_out).astype(param_dtype))
    bo = jnp.full((1, Op), _PAD_BIAS, jnp.float32).at[0, :O].set(
        b_out.astype(jnp.float32))
    return wh_t, bh, wo_t, bo, O


def _pick_batch_tile(C, H, Op, itemsize, budget_bytes=24 * 1024 * 1024):
    """Batch tile sized so double-buffered x/attn/out blocks stay well under
    the scoped VMEM limit (conservative enough for v7x's 64 MiB physical)."""
    per_row = 2 * ((C * H + C) * itemsize + Op * 4)
    tb = budget_bytes // max(per_row, 1)
    tb = int(max(8, min(tb, 4096)))
    return (tb // 8) * 8


def decoder_event_forward(x, attention, wh_t, bh, wo_t, bo, n_out,
                          *, batch_tile=None):
    """Run the DecoderEvent forward pass.

    x         : (B, C, H)   float input samples
    attention : (B, C)      attention weights
    wh_t/bh/wo_t/bo/n_out   : output of prepare_decoder_event_params
    Returns (B, n_out) float32 log-probabilities.
    """
    B, C, H = x.shape
    Hp = wh_t.shape[1]
    Op = wo_t.shape[1]
    in_dtype = wh_t.dtype

    # bf16 (or f32) streaming dtype for the HBM-dominant X / attention traffic.
    x = x.astype(in_dtype)
    attention = attention.astype(in_dtype)

    if batch_tile is None:
        batch_tile = _pick_batch_tile(C, H, Op, jnp.dtype(in_dtype).itemsize)

    if batch_tile >= B:
        tb, b_pad = B, B
    else:
        tb = max(8, (batch_tile // 8) * 8)
        b_pad = _round_up(B, tb)

    if b_pad != B:
        x = jnp.pad(x, ((0, b_pad - B), (0, 0), (0, 0)))
        attention = jnp.pad(attention, ((0, b_pad - B), (0, 0)))

    grid = (b_pad // tb,)

    out = pl.pallas_call(
        decoder_event_kernel,
        out_shape=jax.ShapeDtypeStruct((b_pad, Op), jnp.float32),
        grid=grid,
        in_specs=[
            # streamed per batch tile (double-buffered by Pallas)
            pl.BlockSpec((tb, C, H), lambda i: (i, 0, 0)),
            pl.BlockSpec((tb, C), lambda i: (i, 0)),
            # weights/biases: constant block index -> fetched once, resident
            pl.BlockSpec((H, Hp), lambda i: (0, 0)),
            pl.BlockSpec((1, Hp), lambda i: (0, 0)),
            pl.BlockSpec((Hp, Op), lambda i: (0, 0)),
            pl.BlockSpec((1, Op), lambda i: (0, 0)),
        ],
        out_specs=pl.BlockSpec((tb, Op), lambda i: (i, 0)),
        compiler_params=pltpu.CompilerParams(
            dimension_semantics=("parallel",),   # shard tiles over v7x's 2 TCs
            vmem_limit_bytes=64 * 1024 * 1024,
        ),
    )(x, attention, wh_t, bh, wo_t, bo)

    return out[:B, :n_out]


def _reference(x, attention, w_hidden, b_hidden, w_out, b_out):
    """Plain-JAX reference of the PyTorch forward (high-precision dots)."""
    hp = functools.partial(jnp.einsum, precision="highest")
    attn_applied = hp("bc,bch->bh", attention, x)
    h = jax.nn.relu(hp("bi,oi->bo", attn_applied, w_hidden) + b_hidden)
    logits = hp("bi,oi->bo", h, w_out) + b_out
    return jax.nn.log_softmax(logits, axis=1)


if __name__ == "__main__":
    # Small shapes consistent with the module:
    #   n_samples=2, context_size=8, input_size (hidden)=32, output_size=16
    B, C, H, O = 2, 8, 32, 16

    key = jax.random.PRNGKey(0)
    kx, ka, k1, k2, k3, k4 = jax.random.split(key, 6)

    x = jax.random.normal(kx, (B, C, H), dtype=jnp.float32)
    attention = jax.nn.softmax(
        jax.random.normal(ka, (B, C), dtype=jnp.float32), axis=1)

    # PyTorch-Linear-style init: U(-1/sqrt(in), 1/sqrt(in))
    bnd = 1.0 / (H ** 0.5)
    w_hidden = jax.random.uniform(k1, (H, H), jnp.float32, -bnd, bnd)
    b_hidden = jax.random.uniform(k2, (H,), jnp.float32, -bnd, bnd)
    w_out = jax.random.uniform(k3, (O, H), jnp.float32, -bnd, bnd)
    b_out = jax.random.uniform(k4, (O,), jnp.float32, -bnd, bnd)

    ref = _reference(x, attention, w_hidden, b_hidden, w_out, b_out)

    # 1) f32 path, single batch tile.
    params_f32 = prepare_decoder_event_params(w_hidden, b_hidden, w_out, b_out)
    out = jax.block_until_ready(
        decoder_event_forward(x, attention, *params_f32))
    assert out.shape == (B, O)
    assert jnp.allclose(out, ref, atol=1e-4, rtol=1e-4), "f32 mismatch"

    # 2) exercise the batch-tiled + padded-batch path (grid > 1, B % tile != 0).
    B2 = 20
    x2 = jax.random.normal(kx, (B2, C, H), dtype=jnp.float32)
    attn2 = jax.nn.softmax(
        jax.random.normal(ka, (B2, C), dtype=jnp.float32), axis=1)
    ref2 = _reference(x2, attn2, w_hidden, b_hidden, w_out, b_out)
    out2 = jax.block_until_ready(
        decoder_event_forward(x2, attn2, *params_f32, batch_tile=8))
    assert out2.shape == (B2, O)
    assert jnp.allclose(out2, ref2, atol=1e-4, rtol=1e-4), "tiled mismatch"

    # 3) bf16 X/weights (f32 accumulation) -- halves HBM traffic; loose check.
    params_bf16 = prepare_decoder_event_params(
        w_hidden, b_hidden, w_out, b_out, param_dtype=jnp.bfloat16)
    out3 = jax.block_until_ready(
        decoder_event_forward(x, attention, *params_bf16))
    assert out3.shape == (B, O)
    assert bool(jnp.all(jnp.isfinite(out3)))
    assert jnp.allclose(out3, ref, atol=1e-1, rtol=1e-1), "bf16 mismatch"

    print("KERNEL_OK")
</pallas_src>

<mosaic_0001>
module attributes {stable_mosaic.version = 11 : i64} {
  func.func @decoder_event_kernel(%arg0: i32, %arg1: memref<2x8x32xf32, #tpu.memory_space<vmem>>, %arg2: memref<2x8xf32, #tpu.memory_space<vmem>>, %arg3: memref<32x128xf32, #tpu.memory_space<vmem>>, %arg4: memref<1x128xf32, #tpu.memory_space<vmem>>, %arg5: memref<128x128xf32, #tpu.memory_space<vmem>>, %arg6: memref<1x128xf32, #tpu.memory_space<vmem>>, %arg7: memref<2x128xf32, #tpu.memory_space<vmem>>) attributes {dimension_semantics = [#tpu.dimension_semantics<parallel>], iteration_bounds = array<i64: 1>, scalar_prefetch = 0 : i64, scratch_operands = 0 : i64, tpu.core_type = #tpu.core_type<tc>, window_params = [{transform_indices = @transform_0, window_bounds = array<i64: 2, 8, 32>}, {transform_indices = @transform_1, window_bounds = array<i64: 2, 8>}, {pipeline_mode = #tpu.pipeline_mode<synchronous>, transform_indices = @transform_2, window_bounds = array<i64: 32, 128>}, {pipeline_mode = #tpu.pipeline_mode<synchronous>, transform_indices = @transform_3, window_bounds = array<i64: 1, 128>}, {pipeline_mode = #tpu.pipeline_mode<synchronous>, transform_indices = @transform_4, window_bounds = array<i64: 128, 128>}, {pipeline_mode = #tpu.pipeline_mode<synchronous>, transform_indices = @transform_5, window_bounds = array<i64: 1, 128>}, {transform_indices = @transform_6, window_bounds = array<i64: 2, 128>}]} {
    %c0 = arith.constant 0 : index
    %c0_0 = arith.constant 0 : index
    %c0_1 = arith.constant 0 : index
    %0 = vector.load %arg1[%c0, %c0_0, %c0_1] : memref<2x8x32xf32, #tpu.memory_space<vmem>>, vector<2x8x32xf32>
    %c0_2 = arith.constant 0 : index
    %c0_3 = arith.constant 0 : index
    %1 = vector.load %arg2[%c0_2, %c0_3] : memref<2x8xf32, #tpu.memory_space<vmem>>, vector<2x8xf32>
    %2 = vector.shape_cast %1 : vector<2x8xf32> to vector<2x8x1xf32>
    %3 = vector.broadcast %2 : vector<2x8x1xf32> to vector<2x8x32xf32>
    %4 = arith.mulf %3, %0 : vector<2x8x32xf32>
    %cst = arith.constant dense<0.000000e+00> : vector<2x32xf32>
    %5 = vector.multi_reduction <add>, %4, %cst [1] : vector<2x8x32xf32> to vector<2x32xf32>
    %c0_4 = arith.constant 0 : index
    %c0_5 = arith.constant 0 : index
    %6 = vector.load %arg3[%c0_4, %c0_5] : memref<32x128xf32, #tpu.memory_space<vmem>>, vector<32x128xf32>
    %cst_6 = arith.constant dense<0.000000e+00> : vector<2x128xf32>
    %7 = tpu.matmul %5, %6, %cst_6 {dimension_numbers = #tpu.dot_dimension_numbers<[1], [0], [0], [1], [0, 0, 1, 1], [], []>} : vector<2x32xf32>, vector<32x128xf32>, vector<2x128xf32> -> vector<2x128xf32>
    %c0_7 = arith.constant 0 : index
    %c0_8 = arith.constant 0 : index
    %8 = vector.load %arg4[%c0_7, %c0_8] : memref<1x128xf32, #tpu.memory_space<vmem>>, vector<1x128xf32>
    %9 = vector.broadcast %8 : vector<1x128xf32> to vector<2x128xf32>
    %10 = arith.addf %7, %9 : vector<2x128xf32>
    %cst_9 = arith.constant 0.000000e+00 : f32
    %11 = vector.broadcast %cst_9 : f32 to vector<2x128xf32>
    %12 = arith.maximumf %10, %11 : vector<2x128xf32>
    %c0_10 = arith.constant 0 : index
    %c0_11 = arith.constant 0 : index
    %13 = vector.load %arg5[%c0_10, %c0_11] : memref<128x128xf32, #tpu.memory_space<vmem>>, vector<128x128xf32>
    %cst_12 = arith.constant dense<0.000000e+00> : vector<2x128xf32>
    %14 = tpu.matmul %12, %13, %cst_12 {dimension_numbers = #tpu.dot_dimension_numbers<[1], [0], [0], [1], [0, 0, 1, 1], [], []>} : vector<2x128xf32>, vector<128x128xf32>, vector<2x128xf32> -> vector<2x128xf32>
    %c0_13 = arith.constant 0 : index
    %c0_14 = arith.constant 0 : index
    %15 = vector.load %arg6[%c0_13, %c0_14] : memref<1x128xf32, #tpu.memory_space<vmem>>, vector<1x128xf32>
    %16 = vector.broadcast %15 : vector<1x128xf32> to vector<2x128xf32>
    %17 = arith.addf %14, %16 : vector<2x128xf32>
    %cst_15 = arith.constant dense<0xFF800000> : vector<2xf32>
    %18 = vector.multi_reduction <maximumf>, %17, %cst_15 [1] : vector<2x128xf32> to vector<2xf32>
    %19 = vector.shape_cast %18 : vector<2xf32> to vector<2x1xf32>
    %20 = vector.broadcast %19 : vector<2x1xf32> to vector<2x128xf32>
    %21 = arith.subf %17, %20 : vector<2x128xf32>
    %22 = math.exp %21 : vector<2x128xf32>
    %cst_16 = arith.constant dense<0.000000e+00> : vector<2xf32>
    %23 = vector.multi_reduction <add>, %22, %cst_16 [1] : vector<2x128xf32> to vector<2xf32>
    %24 = vector.shape_cast %23 : vector<2xf32> to vector<2x1xf32>
    %25 = math.log %24 : vector<2x1xf32>
    %26 = vector.broadcast %25 : vector<2x1xf32> to vector<2x128xf32>
    %27 = arith.subf %21, %26 : vector<2x128xf32>
    %c0_17 = arith.constant 0 : index
    %c0_18 = arith.constant 0 : index
    %28 = vector.load %arg7[%c0_17, %c0_18] : memref<2x128xf32, #tpu.memory_space<vmem>>, vector<2x128xf32>
    tpu.vector_store %arg7[%c0_17, %c0_18], %27 {strides = array<i32>} : memref<2x128xf32, #tpu.memory_space<vmem>>, vector<2x128xf32>,
    return
  }
  func.func @transform_0(%arg0: i32) -> (i32, i32, i32) {
    %c0_i32 = arith.constant 0 : i32
    %c0_i32_0 = arith.constant 0 : i32
    %c0_i32_1 = arith.constant 0 : i32
    return %arg0, %c0_i32, %c0_i32_0 : i32, i32, i32
  }
  func.func @transform_1(%arg0: i32) -> (i32, i32) {
    %c0_i32 = arith.constant 0 : i32
    %c0_i32_0 = arith.constant 0 : i32
    return %arg0, %c0_i32 : i32, i32
  }
  func.func @transform_2(%arg0: i32) -> (i32, i32) {
    %c0_i32 = arith.constant 0 : i32
    %c0_i32_0 = arith.constant 0 : i32
    %c0_i32_1 = arith.constant 0 : i32
    return %c0_i32, %c0_i32_0 : i32, i32
  }
  func.func @transform_3(%arg0: i32) -> (i32, i32) {
    %c0_i32 = arith.constant 0 : i32
    %c0_i32_0 = arith.constant 0 : i32
    %c0_i32_1 = arith.constant 0 : i32
    return %c0_i32, %c0_i32_0 : i32, i32
  }
  func.func @transform_4(%arg0: i32) -> (i32, i32) {
    %c0_i32 = arith.constant 0 : i32
    %c0_i32_0 = arith.constant 0 : i32
    %c0_i32_1 = arith.constant 0 : i32
    return %c0_i32, %c0_i32_0 : i32, i32
  }
  func.func @transform_5(%arg0: i32) -> (i32, i32) {
    %c0_i32 = arith.constant 0 : i32
    %c0_i32_0 = arith.constant 0 : i32
    %c0_i32_1 = arith.constant 0 : i32
    return %c0_i32, %c0_i32_0 : i32, i32
  }
  func.func @transform_6(%arg0: i32) -> (i32, i32) {
    %c0_i32 = arith.constant 0 : i32
    %c0_i32_0 = arith.constant 0 : i32
    return %arg0, %c0_i32 : i32, i32
  }
}

</mosaic_0001>

<llo_original>
// kernel: tpu_custom_call.1
$region0: #{tpu_custom_call.1}
  #allocation0 [shape = 'u32[]', space=smem, size = 0x4, offset = 0x4, fixed_abs, tag = 'smem constant byte address 0x4 - core index']
  #allocation1 [shape = 'u32[144,128]{1,0:T(1,128)}', space=vmem, size = 0x12000, scoped, tag = 'internal scratch']
  %s0 = inlined_call_operand.hbm [shape: f32[2,8,32], index: 0, kind: input, shape index: {}]
  %s1 = inlined_call_operand.hbm [shape: f32[2,8], index: 1, kind: input, shape index: {}]
  %s2 = inlined_call_operand.hbm [shape: f32[32,128], index: 2, kind: input, shape index: {}]
  %s3 = inlined_call_operand.hbm [shape: f32[1,128], index: 3, kind: input, shape index: {}]
  %s4 = inlined_call_operand.hbm [shape: f32[128,128], index: 4, kind: input, shape index: {}]
  %s5 = inlined_call_operand.hbm [shape: f32[1,128], index: 5, kind: input, shape index: {}]
  %s6 = inlined_call_operand.hbm [shape: f32[2,128], index: 6, kind: output, shape index: {}]
  %s7 = sld [smem:[#allocation0]]
  $region58: #{tpu_custom_call.1} parent=0
    _
  %s9 = ssub.s32 1, %s7
  %s10 = scalar_select 0, %s9, %s7
  $region1: #{tpu_custom_call.1} parent=0
    #allocation2 [shape = 'u8[8192]{0}', space=vmem, size = 0x2000, scoped, tag = 'input window, operand 0, single buffered']
    #allocation3 [shape = 's32[1]{0}', space=sflag, size = 0x4, scoped, tag = 'scoped memory for tpu_custom_call.1']
    #allocation4 [shape = 's32[1]{0}', space=sflag, size = 0x4, scoped, tag = 'scoped memory for tpu_custom_call.1']
    #allocation5 [shape = 'u8[1024]{0}', space=vmem, size = 0x400, scoped, tag = 'input window, operand 1, single buffered']
    #allocation6 [shape = 's32[1]{0}', space=sflag, size = 0x4, scoped, tag = 'scoped memory for tpu_custom_call.1']
    #allocation7 [shape = 'u8[16384]{0}', space=vmem, size = 0x4000, scoped, tag = 'input window, operand 2, single buffered']
    #allocation8 [shape = 'u8[512]{0}', space=vmem, size = 0x400, scoped, tag = 'input window, operand 3, single buffered']
    #allocation9 [shape = 's32[1]{0}', space=sflag, size = 0x4, scoped, tag = 'scoped memory for tpu_custom_call.1']
    #allocation10 [shape = 'u8[65536]{0}', space=vmem, size = 0x10000, scoped, tag = 'input window, operand 4, single buffered']
    #allocation11 [shape = 'u8[512]{0}', space=vmem, size = 0x400, scoped, tag = 'input window, operand 5, single buffered']
    #allocation12 [shape = 's32[1]{0}', space=sflag, size = 0x4, scoped, tag = 'scoped memory for tpu_custom_call.1']
    #allocation13 [shape = 'u8[1024]{0}', space=vmem, size = 0x400, scoped, tag = 'output window, operand 0, single buffered']
    %11 = vsyncpa [#allocation3], 0
    %12 = vsyncpa [#allocation6], 0
    %13 = vsyncpa [#allocation9], 0
    %14 = vsyncpa [#allocation12], 0
    %15 = vsyncpa [#allocation4], 0
    // Predicated region
    $region2: #{tpu_custom_call.1} parent=1 // pred_check
      _
    $region3: #{tpu_custom_call.1} parent=1 // pred_check_branch
      %17 = sbr.rel (0) target = $region5
    $region4: #{tpu_custom_call.1} parent=1 // pred_region
      %s19 = ssub.s32 256, 256
      %20 = vsyncadd [#allocation3], %s19
      %s21 = sshll.u32 [#allocation2], 4
      %s22 = int_to_ptr.vmem [resolvable:$true] %s21
      %27 = dma.hbm_to_vmem [thread:$0]  %s0, 256, %s22, [#allocation3], 128, 128, 8
    $region5: #{tpu_custom_call.1} parent=1 // pred_fallthru
      _
    // Predicated region
    $region6: #{tpu_custom_call.1} parent=1 // pred_check
      _
    $region7: #{tpu_custom_call.1} parent=1 // pred_check_branch
      %29 = sbr.rel (0) target = $region9
    $region8: #{tpu_custom_call.1} parent=1 // pred_region
      %s31 = ssub.s32 32, 32
      %32 = vsyncadd [#allocation6], %s31
      %s34 = sshll.u32 [#allocation5], 4
      %s35 = int_to_ptr.vmem [resolvable:$true] %s34
      %37 = dma.hbm_to_vmem [thread:$0]  %s1, 32, %s35, [#allocation6]
    $region9: #{tpu_custom_call.1} parent=1 // pred_fallthru
      _
    // Predicated region
    $region10: #{tpu_custom_call.1} parent=1 // pred_check
      _
    $region11: #{tpu_custom_call.1} parent=1 // pred_check_branch
      %39 = sbr.rel (0) target = $region13
    $region12: #{tpu_custom_call.1} parent=1 // pred_region
      %s41 = ssub.s32 512, 512
      %42 = vsyncadd [#allocation6], %s41
      %s43 = sshll.u32 [#allocation7], 4
      %s44 = int_to_ptr.vmem [resolvable:$true] %s43
      %49 = dma.hbm_to_vmem [thread:$0]  %s2, 512, %s44, [#allocation6], 128, 128, 8
    $region13: #{tpu_custom_call.1} parent=1 // pred_fallthru
      _
    // Predicated region
    $region14: #{tpu_custom_call.1} parent=1 // pred_check
      _
    $region15: #{tpu_custom_call.1} parent=1 // pred_check_branch
      %51 = sbr.rel (0) target = $region17
    $region16: #{tpu_custom_call.1} parent=1 // pred_region
      %s53 = ssub.s32 16, 16
      %54 = vsyncadd [#allocation9], %s53
      %s56 = sshll.u32 [#allocation8], 4
      %s57 = int_to_ptr.vmem [resolvable:$true] %s56
      %59 = dma.hbm_to_vmem [thread:$0]  %s3, 16, %s57, [#allocation9]
    $region17: #{tpu_custom_call.1} parent=1 // pred_fallthru
      _
    // Predicated region
    $region18: #{tpu_custom_call.1} parent=1 // pred_check
      _
    $region19: #{tpu_custom_call.1} parent=1 // pred_check_branch
      %61 = sbr.rel (0) target = $region21
    $region20: #{tpu_custom_call.1} parent=1 // pred_region
      %s63 = ssub.s32 2048, 2048
      %64 = vsyncadd [#allocation9], %s63
      %s65 = sshll.u32 [#allocation10], 4
      %s66 = int_to_ptr.vmem [resolvable:$true] %s65
      %71 = dma.hbm_to_vmem [thread:$0]  %s4, 2048, %s66, [#allocation9], 128, 128, 8
    $region21: #{tpu_custom_call.1} parent=1 // pred_fallthru
      _
    // Predicated region
    $region22: #{tpu_custom_call.1} parent=1 // pred_check
      _
    $region23: #{tpu_custom_call.1} parent=1 // pred_check_branch
      %73 = sbr.rel (0) target = $region25
    $region24: #{tpu_custom_call.1} parent=1 // pred_region
      %s75 = ssub.s32 16, 16
      %76 = vsyncadd [#allocation12], %s75
      %s78 = sshll.u32 [#allocation11], 4
      %s79 = int_to_ptr.vmem [resolvable:$true] %s78
      %81 = dma.hbm_to_vmem [thread:$0]  %s5, 16, %s79, [#allocation12]
    $region25: #{tpu_custom_call.1} parent=1 // pred_fallthru
      _
    // Predicated region
    $region26: #{tpu_custom_call.1} parent=1 // pred_check
      _
    $region27: #{tpu_custom_call.1} parent=1 // pred_check_branch
      %83 = sbr.rel (0) target = $region29
    $region28: #{tpu_custom_call.1} parent=1 // pred_region
      %84 = dma.done [#allocation3], 256
    $region29: #{tpu_custom_call.1} parent=1 // pred_fallthru
      _
    // Predicated region
    $region30: #{tpu_custom_call.1} parent=1 // pred_check
      _
    $region31: #{tpu_custom_call.1} parent=1 // pred_check_branch
      %86 = sbr.rel (0) target = $region33
    $region32: #{tpu_custom_call.1} parent=1 // pred_region
      %87 = dma.done [#allocation6], 32
    $region33: #{tpu_custom_call.1} parent=1 // pred_fallthru
      _
    // Predicated region
    $region34: #{tpu_custom_call.1} parent=1 // pred_check
      _
    $region35: #{tpu_custom_call.1} parent=1 // pred_check_branch
      %89 = sbr.rel (0) target = $region37
    $region36: #{tpu_custom_call.1} parent=1 // pred_region
      %90 = dma.done [#allocation6], 512
    $region37: #{tpu_custom_call.1} parent=1 // pred_fallthru
      _
    // Predicated region
    $region38: #{tpu_custom_call.1} parent=1 // pred_check
      _
    $region39: #{tpu_custom_call.1} parent=1 // pred_check_branch
      %92 = sbr.rel (0) target = $region41
    $region40: #{tpu_custom_call.1} parent=1 // pred_region
      %93 = dma.done [#allocation9], 16
    $region41: #{tpu_custom_call.1} parent=1 // pred_fallthru
      _
    // Predicated region
    $region42: #{tpu_custom_call.1} parent=1 // pred_check
      _
    $region43: #{tpu_custom_call.1} parent=1 // pred_check_branch
      %95 = sbr.rel (0) target = $region45
    $region44: #{tpu_custom_call.1} parent=1 // pred_region
      %96 = dma.done [#allocation9], 2048
    $region45: #{tpu_custom_call.1} parent=1 // pred_fallthru
      _
    // Predicated region
    $region46: #{tpu_custom_call.1} parent=1 // pred_check
      _
    $region47: #{tpu_custom_call.1} parent=1 // pred_check_branch
      %98 = sbr.rel (0) target = $region49
    $region48: #{tpu_custom_call.1} parent=1 // pred_region
      %99 = dma.done [#allocation12], 16
    $region49: #{tpu_custom_call.1} parent=1 // pred_fallthru
      _
    %v100 = vld [vmem:[#allocation2] sm:$0xff]
    %v101 = vld [vmem:[#allocation2 + $0x8] sm:$0xff]
    %v102 = vld [vmem:[#allocation5] sm:$0x3]
    %v103 = vlaneseq
    %v104 = vshrl.u32 %v103, 7
    %v105 = vsub.s32 0, %v104
    %v106 = vrot.slane %v102, %v105
    %108 = vbcast.lane.b32.xlu0 %v106, 256
    %v109 = vpop.permute.xlu0 %108
    %v110 = vlaneseq
    %v111 = vshrl.u32 %v110, 7
    %v112 = vsub.s32 1, %v111
    %v113 = vrot.slane %v102, %v112
    %115 = vbcast.lane.b32.xlu0 %v113, 256
    %v116 = vpop.permute.xlu0 %115
    %v117 = vmul.f32 %v109, %v100
    %v118 = vmul.f32 %v116, %v101
    %vm119 = vcmask 261120
    %v120 = vsel %vm119, %v117, 0.0
    %v121 = vrot.slane %v120, 4
    %v122 = vadd.f32 %v120, %v121
    %v123 = vrot.slane %v122, 2
    %v124 = vadd.f32 %v122, %v123
    %v125 = vrot.slane %v124, 1
    %v126 = vadd.f32 %v124, %v125
    %v127 = vsel %vm119, %v118, 0.0
    %v128 = vrot.slane %v127, 4
    %v129 = vadd.f32 %v127, %v128
    %v130 = vrot.slane %v129, 2
    %v131 = vadd.f32 %v129, %v130
    %v132 = vrot.slane %v131, 1
    %v133 = vadd.f32 %v131, %v132
    %v134 = vld [vmem:[#allocation7] sm:$0xff]
    %v135 = vld [vmem:[#allocation7 + $0x8] sm:$0xff]
    %v136 = vld [vmem:[#allocation7 + $0x10] sm:$0xff]
    %v137 = vld [vmem:[#allocation7 + $0x18] sm:$0xff]
    %v138 = vld [vmem:[#allocation8] sm:$0x1]
    %v140 = vlaneseq
    %v141 = vshrl.u32 %v140, 7
    %v142 = vsub.s32 0, %v141
    %v143 = vrot.slane %v138, %v142
    %vm147 = vcmask 1041409
    %v148 = vsel %vm147, %v133, %v126
    %v149 = vsel %vm119, %v148, 0
    %151 = vmatprep.subr.mxu0 0.0
    %152 = vmatpush1.msra.mxu0 %v134
    %153 = vmatprep.subr.mxu0 0.0
    %154 = vmatpush1.msra.mxu0 %v135
    %155 = vmatprep.subr.mxu0 0.0
    %156 = vmatpush1.msra.mxu0 %v136
    %157 = vmatprep.subr.mxu0 0.0
    %158 = vmatpush1.msra.mxu0 %v137
    %159 = vmatprep.subr.mxu0 0.0
    %160 = vmatpush1.msra.mxu0 0.0
    %161 = vmatprep.subr.mxu0 0.0
    %162 = vmatpush1.msra.mxu0 0.0
    %163 = vmatprep.subr.mxu0 0.0
    %164 = vmatpush1.msra.mxu0 0.0
    %165 = vmatprep.subr.mxu0 0.0
    %166 = vmatpush1.msra.mxu0 0.0
    %167 = vmatprep.subr.mxu0 0.0
    %168 = vmatpush1.msra.mxu0 0.0
    %169 = vmatprep.subr.mxu0 0.0
    %170 = vmatpush1.msra.mxu0 0.0
    %171 = vmatprep.subr.mxu0 0.0
    %172 = vmatpush1.msra.mxu0 0.0
    %173 = vmatprep.subr.mxu0 0.0
    %174 = vmatpush1.msra.mxu0 0.0
    %175 = vmatprep.subr.mxu0 0.0
    %176 = vmatpush1.msra.mxu0 0.0
    %177 = vmatprep.subr.mxu0 0.0
    %178 = vmatpush1.msra.mxu0 0.0
    %179 = vmatprep.subr.mxu0 0.0
    %180 = vmatpush1.msra.mxu0 0.0
    %181 = vmatprep.subr.mxu0 0.0
    %182 = vmatpush1.msra.mxu0 0.0
    %183 = vmatprep.subr.mxu0 0.0
    %184 = vmatpush1.msra.mxu0 0.0
    %185 = vmatprep.subr.mxu0 0.0
    %186 = vmatpush1.msra.mxu0 0.0
    %187 = vmatprep.subr.mxu0 0.0
    %188 = vmatpush1.msra.mxu0 0.0
    %189 = vmatprep.subr.mxu0 0.0
    %190 = vmatpush1.msra.mxu0 0.0
    %191 = vmatprep.subr.mxu0 0.0
    %192 = vmatpush1.msra.mxu0 0.0
    %193 = vmatprep.subr.mxu0 0.0
    %194 = vmatpush1.msra.mxu0 0.0
    %195 = vmatprep.subr.mxu0 0.0
    %196 = vmatpush1.msra.mxu0 0.0
    %197 = vmatprep.subr.mxu0 0.0
    %198 = vmatpush1.msra.mxu0 0.0
    %199 = vmatprep.subr.mxu0 0.0
    %200 = vmatpush1.msra.mxu0 0.0
    %201 = vmatprep.subr.mxu0 0.0
    %202 = vmatpush1.msra.mxu0 0.0
    %203 = vmatprep.subr.mxu0 0.0
    %204 = vmatpush1.msra.mxu0 0.0
    %205 = vmatprep.subr.mxu0 0.0
    %206 = vmatpush1.msra.mxu0 0.0
    %207 = vmatprep.subr.mxu0 0.0
    %208 = vmatpush1.msra.mxu0 0.0
    %209 = vmatprep.subr.mxu0 0.0
    %210 = vmatpush1.msra.mxu0 0.0
    %211 = vmatprep.subr.mxu0 0.0
    %212 = vmatpush1.msra.mxu0 0.0
    %213 = vmatprep.subr.mxu0 0.0
    %214 = vmatpush1.msra.mxu0 0.0
    %215 = vmatprep.mubr.f32.mxu0 0.0
    %216 = vmatmul.mubr.f32.gmra.mrb[0].mxu0 %v149
    %v217 = vpop.f32.mrb[0].mxu0
    %v218 = vadd.f32 %v143, %v217
    %v219 = vpop.f32.mrb[0].mxu0
    %220 = vdwg.mxu0
    %v221 = vmax.f32 %v218, 0.0
    %v222 = vld [vmem:[#allocation10] sm:$0xff]
    %v223 = vld [vmem:[#allocation10 + $0x8] sm:$0xff]
    %v224 = vld [vmem:[#allocation10 + $0x10] sm:$0xff]
    %v225 = vld [vmem:[#allocation10 + $0x18] sm:$0xff]
    %v226 = vld [vmem:[#allocation10 + $0x20] sm:$0xff]
    %v227 = vld [vmem:[#allocation10 + $0x28] sm:$0xff]
    %v228 = vld [vmem:[#allocation10 + $0x30] sm:$0xff]
    %v229 = vld [vmem:[#allocation10 + $0x38] sm:$0xff]
    %v230 = vld [vmem:[#allocation10 + $0x40] sm:$0xff]
    %v231 = vld [vmem:[#allocation10 + $0x48] sm:$0xff]
    %v232 = vld [vmem:[#allocation10 + $0x50] sm:$0xff]
    %v233 = vld [vmem:[#allocation10 + $0x58] sm:$0xff]
    %v234 = vld [vmem:[#allocation10 + $0x60] sm:$0xff]
    %v235 = vld [vmem:[#allocation10 + $0x68] sm:$0xff]
    %v236 = vld [vmem:[#allocation10 + $0x70] sm:$0xff]
    %v237 = vld [vmem:[#allocation10 + $0x78] sm:$0xff]
    %v238 = vld [vmem:[#allocation11] sm:$0x1]
    %v240 = vlaneseq
    %v241 = vshrl.u32 %v240, 7
    %v242 = vsub.s32 0, %v241
    %v243 = vrot.slane %v238, %v242
    %245 = vmatprep.subr.mxu0 0.0
    %246 = vmatpush1.msra.mxu0 %v222
    %247 = vmatprep.subr.mxu0 0.0
    %248 = vmatpush1.msra.mxu0 %v223
    %249 = vmatprep.subr.mxu0 0.0
    %250 = vmatpush1.msra.mxu0 %v224
    %251 = vmatprep.subr.mxu0 0.0
    %252 = vmatpush1.msra.mxu0 %v225
    %253 = vmatprep.subr.mxu0 0.0
    %254 = vmatpush1.msra.mxu0 %v226
    %255 = vmatprep.subr.mxu0 0.0
    %256 = vmatpush1.msra.mxu0 %v227
    %257 = vmatprep.subr.mxu0 0.0
    %258 = vmatpush1.msra.mxu0 %v228
    %259 = vmatprep.subr.mxu0 0.0
    %260 = vmatpush1.msra.mxu0 %v229
    %261 = vmatprep.subr.mxu0 0.0
    %262 = vmatpush1.msra.mxu0 %v230
    %263 = vmatprep.subr.mxu0 0.0
    %264 = vmatpush1.msra.mxu0 %v231
    %265 = vmatprep.subr.mxu0 0.0
    %266 = vmatpush1.msra.mxu0 %v232
    %267 = vmatprep.subr.mxu0 0.0
    %268 = vmatpush1.msra.mxu0 %v233
    %269 = vmatprep.subr.mxu0 0.0
    %270 = vmatpush1.msra.mxu0 %v234
    %271 = vmatprep.subr.mxu0 0.0
    %272 = vmatpush1.msra.mxu0 %v235
    %273 = vmatprep.subr.mxu0 0.0
    %274 = vmatpush1.msra.mxu0 %v236
    %275 = vmatprep.subr.mxu0 0.0
    %276 = vmatpush1.msra.mxu0 %v237
    %277 = vmatprep.subr.mxu0 0.0
    %278 = vmatpush1.msra.mxu0 0.0
    %279 = vmatprep.subr.mxu0 0.0
    %280 = vmatpush1.msra.mxu0 0.0
    %281 = vmatprep.subr.mxu0 0.0
    %282 = vmatpush1.msra.mxu0 0.0
    %283 = vmatprep.subr.mxu0 0.0
    %284 = vmatpush1.msra.mxu0 0.0
    %285 = vmatprep.subr.mxu0 0.0
    %286 = vmatpush1.msra.mxu0 0.0
    %287 = vmatprep.subr.mxu0 0.0
    %288 = vmatpush1.msra.mxu0 0.0
    %289 = vmatprep.subr.mxu0 0.0
    %290 = vmatpush1.msra.mxu0 0.0
    %291 = vmatprep.subr.mxu0 0.0
    %292 = vmatpush1.msra.mxu0 0.0
    %293 = vmatprep.subr.mxu0 0.0
    %294 = vmatpush1.msra.mxu0 0.0
    %295 = vmatprep.subr.mxu0 0.0
    %296 = vmatpush1.msra.mxu0 0.0
    %297 = vmatprep.subr.mxu0 0.0
    %298 = vmatpush1.msra.mxu0 0.0
    %299 = vmatprep.subr.mxu0 0.0
    %300 = vmatpush1.msra.mxu0 0.0
    %301 = vmatprep.subr.mxu0 0.0
    %302 = vmatpush1.msra.mxu0 0.0
    %303 = vmatprep.subr.mxu0 0.0
    %304 = vmatpush1.msra.mxu0 0.0
    %305 = vmatprep.subr.mxu0 0.0
    %306 = vmatpush1.msra.mxu0 0.0
    %307 = vmatprep.subr.mxu0 0.0
    %308 = vmatpush1.msra.mxu0 0.0
    %309 = vmatprep.mubr.f32.mxu0 0.0
    %310 = vmatmul.mubr.f32.gmra.mrb[0].mxu0 %v221
    %v311 = vpop.f32.mrb[0].mxu0
    %v312 = vadd.f32 %v243, %v311
    %v313 = vpop.f32.mrb[0].mxu0
    %314 = vdwg.mxu0
    %vm315 = vcmask 1041408
    %v316 = vsel %vm315, %v312, -inf
    %317 = vmax.xlane.f32.xlu0 %v316
    %v318 = vpop.xlane.xlu0 %317
    %v319 = vsub.f32 %v312, %v318
    %v320 = vmul.f32 %v319, 1.442695
    %v321 = vpow.pop %v320
    %v322 = vsel %vm315, %v321, 0.0
    %323 = vadd.xlane.f32.xlu0 %v322
    %v324 = vpop.xlane.xlu0 %323
    %v325 = vlog2.pop %v324
    %v326 = vmul.f32 %v325, 0.6931472
    %v327 = vsub.f32 %v319, %v326
    %328 = vst [vmem:[#allocation13] sm:$0x3] %v327
    // Predicated region
    $region50: #{tpu_custom_call.1} parent=1 // pred_check
      _
    $region51: #{tpu_custom_call.1} parent=1 // pred_check_branch
      %330 = sbr.rel (0) target = $region53
    $region52: #{tpu_custom_call.1} parent=1 // pred_region
      %s332 = ssub.s32 32, 32
      %333 = vsyncadd [#allocation4], %s332
      %s335 = sshll.u32 [#allocation13], 4
      %s336 = int_to_ptr.vmem [resolvable:$true] %s335
      %338 = dma.vmem_to_hbm [thread:$0]  %s336, 32, %s6, [#allocation4]
    $region53: #{tpu_custom_call.1} parent=1 // pred_fallthru
      _
    // Predicated region
    $region54: #{tpu_custom_call.1} parent=1 // pred_check
      _
    $region55: #{tpu_custom_call.1} parent=1 // pred_check_branch
      %340 = sbr.rel (0) target = $region57
    $region56: #{tpu_custom_call.1} parent=1 // pred_region
      %341 = dma.done [#allocation4], 32
    $region57: #{tpu_custom_call.1} parent=1 // pred_fallthru
      _
    %342 = vsyncpa [#allocation3], 1
    %343 = vsyncpa [#allocation6], 1
    %344 = vsyncpa [#allocation9], 1
    %345 = vsyncpa [#allocation12], 1
    %346 = vsyncpa [#allocation4], 1

</llo_original>
